<compile_context>
chip_gen: v7x
topology: tpu7x:2x2x1
jax: 0.10.0
libtpu: 0.0.40
codegen_flags: <defaults>
</compile_context>

<pallas_src>
import functools

import jax
import jax.numpy as jnp
from jax.experimental import pallas as pl
from jax.experimental.pallas import tpu as pltpu


def _ceil_to(x, m):
    return -(-x // m) * m


# ---------------------------------------------------------------------------
# Block-Toeplitz ("band") weight: one (Cpad, Wo*OC) matrix per kernel row kh.
#   Wband[kh, q*IC + ci, wo*OC + co] = kernel[co, ci, kh, q + pad_w - stride*wo]
# (zero when the kw tap falls outside [0, K) — this folds the width padding and the
#  width stride into the weight, so the kernel never pads / strides the activation width.)
# Rows are zero-padded from W*IC up to c_pad so the MXU contraction is lane-aligned.
# ---------------------------------------------------------------------------
def _band_weight(kernel, *, W, pad_w, stride, Wo, c_pad):
    OC, IC, K, _ = kernel.shape
    w_t = jnp.transpose(kernel, (2, 3, 1, 0))                # (K, K, IC, OC)
    q = jnp.arange(W)[:, None]                                # input column index
    wo = jnp.arange(Wo)[None, :]                              # output column index
    kw = q + pad_w - stride * wo                              # (W, Wo) tap index
    valid = (kw >= 0) & (kw < K)
    kw_safe = jnp.clip(kw, 0, K - 1)
    g = w_t[:, kw_safe]                                       # (K, W, Wo, IC, OC)
    g = jnp.where(valid[None, :, :, None, None], g, jnp.zeros((), kernel.dtype))
    g = jnp.transpose(g, (0, 1, 3, 2, 4)).reshape(K, W * IC, Wo * OC)
    return jnp.pad(g, ((0, 0), (0, c_pad - W * IC), (0, 0)))


# ---------------------------------------------------------------------------
# Static per-tap row windows.  For tap kh, output rows [r0, r0+nrows) read the
# CONTIGUOUS rows [j0, j0+nrows) of the phase-`phi` row plane of the activation
# (phase plane phi holds input rows i with i % stride == phi).  Height padding is
# handled purely by these static ranges — no padded scratch, no copy.
# ---------------------------------------------------------------------------
def _row_taps(*, K, stride, pad_h, H, Ho):
    taps = []
    for kh in range(K):
        d = kh - pad_h
        phi = d % stride
        m = (d - phi) // stride
        n_phi = (H - 1 - phi) // stride + 1 if phi < H else 0   # rows in this phase plane
        r0 = max(0, -m)
        r1 = min(Ho, n_phi - m)
        if r1 > r0:
            taps.append((kh, phi, r0 + m, r0, r1 - r0))
    return tuple(taps)


# ---------------------------------------------------------------------------
# Pallas kernel: one (image-block, wo-tile) pair per grid step.
#   x_ref   (nb, S, Hs, Cpad)   phase-split, lane-packed activation block
#   w_ref   (K, Cpad, Twoc)     band weights for this wo tile
#   o_ref   (nb, Ho, Twoc)      lane-dense output block
#   acc_ref (nb, Ho, Twoc) f32  VMEM accumulator scratch
# len(taps) accumulating MXU matmuls per image; contraction = Cpad (>=128);
# output lanes = Twoc (multiple of 128).  No image copies, no strided reads.
# ---------------------------------------------------------------------------
def _repconv_kernel(x_ref, w_ref, o_ref, acc_ref, *, taps, nb):
    acc_ref[...] = jnp.zeros(acc_ref.shape, acc_ref.dtype)
    for kh, phi, j0, r0, nrows in taps:
        w_k = w_ref[kh]                                       # (Cpad, Twoc), reused over images
        for b in range(nb):                                   # small static loop; amortizes step cost
            slab = x_ref[b, phi, j0:j0 + nrows, :]            # (nrows, Cpad) contiguous rows
            acc_ref[b, r0:r0 + nrows, :] += jnp.dot(
                slab, w_k, preferred_element_type=jnp.float32)
    o_ref[...] = acc_ref[...].astype(o_ref.dtype)


def repconv_forward(x_nchw, weight, convmap_w, *, stride, padding=None, groups=1, map_k=3,
                    wo_tile=None, images_per_block=None, mxu_dtype=None, out_layout="NCHW"):
    """RepConv.forward.  x_nchw: (N, Cin, H, W); weight: (OC, Cin, K, K);
    convmap_w: (OC*Cin, 1, map_k, map_k).  out_layout: "NCHW" (PyTorch parity, default),
    "NHWC", or "tokens" ((N, Ho*Wo, OC) — what ConvEmbed produces right after the conv,
    skipping the output transpose)."""
    assert groups == 1, "grouped RepConv not implemented (ConvEmbed uses groups=1)"
    OC, IC, K, _ = weight.shape
    if padding is None:
        padding = K // 2

    # --- reparameterized kernel = weight + convmap(weight-as-image): tiny, weight-only -> XLA
    C2d = OC * IC
    delta = jax.lax.conv_general_dilated(
        weight.reshape(1, C2d, K, K), convmap_w, window_strides=(1, 1),
        padding=[(map_k // 2, map_k // 2)] * 2,
        dimension_numbers=("NCHW", "OIHW", "NCHW"), feature_group_count=C2d)
    kernel = weight + delta.reshape(OC, IC, K, K)

    # --- main convolution (Pallas) --------------------------------------------------------
    N, _, H, W = x_nchw.shape
    Ho = (H + 2 * padding - K) // stride + 1
    Wo = (W + 2 * padding - K) // stride + 1
    c_fused = W * IC
    c_pad = _ceil_to(c_fused, 128)              # lane-align contraction (>=128-deep MXU)
    Hs = -(-H // stride)                        # rows per phase plane

    # Images per grid step: amortize per-step overhead on single-TC chips while keeping
    # >=2 grid steps so both v7x TensorCores get work.
    nb = images_per_block
    if nb is None:
        nb = N // 2 if N >= 2 else 1
        if N % nb != 0:
            nb = 1
    assert N % nb == 0, (N, nb)

    # wo tile: lane-dense (Tw*OC multiple of 128) and small enough that the per-tile band
    # weight stays a few MB in VMEM (critical under v7x's 64 MiB budget at CCT scale).
    if wo_tile is None:
        budget = 8 << 20
        wo_tile = Wo
        for cand in sorted((d for d in range(1, Wo + 1) if Wo % d == 0), reverse=True):
            if (cand * OC) % 128 != 0 and cand != Wo:
                continue
            if K * c_pad * cand * OC * 4 <= budget:
                wo_tile = cand
                break
    assert Wo % wo_tile == 0
    assert (wo_tile * OC) % 128 == 0 or wo_tile == Wo
    n_wo_tiles = Wo // wo_tile
    twoc = wo_tile * OC

    # Phase-split, lane-packed activation: x_ph[n, phase, j, w*IC+ci] = x[n, ci, j*stride+phase, w].
    # One fused XLA transpose/pad; every in-kernel tap then reads contiguous rows.
    # TODO(synk): this transform disappears if the upstream producer emits this layout.
    x = jnp.transpose(x_nchw, (0, 2, 3, 1)).reshape(N, H, c_fused)
    x = jnp.pad(x, ((0, 0), (0, Hs * stride - H), (0, c_pad - c_fused)))
    x_ph = jnp.transpose(x.reshape(N, Hs, stride, c_pad), (0, 2, 1, 3))   # (N, S, Hs, Cpad)

    w_big = _band_weight(kernel, W=W, pad_w=padding, stride=stride, Wo=Wo, c_pad=c_pad)

    if mxu_dtype is not None:                   # optional bf16 MXU feed (f32 accumulate)
        x_ph = x_ph.astype(mxu_dtype)
        w_big = w_big.astype(mxu_dtype)

    taps = _row_taps(K=K, stride=stride, pad_h=padding, H=H, Ho=Ho)

    out_dtype = x_nchw.dtype
    itm = jnp.dtype(x_ph.dtype).itemsize
    otm = jnp.dtype(out_dtype).itemsize
    x_blk = nb * stride * Hs * c_pad * itm
    w_blk = K * c_pad * twoc * itm
    o_blk = nb * Ho * twoc * otm
    acc_b = nb * Ho * twoc * 4
    vmem_need = 2 * (x_blk + w_blk + o_blk) + acc_b           # 2x = double-buffered blocks
    vmem_limit = int(min(128 << 20, max(32 << 20, 2 * vmem_need)))

    cost = pl.CostEstimate(
        flops=int(2 * N * Ho * K * c_pad * Wo * OC),
        transcendentals=0,
        bytes_accessed=int(x_ph.size * itm + (N // nb) * w_big.size * itm
                           + N * Ho * Wo * OC * otm))

    out = pl.pallas_call(
        functools.partial(_repconv_kernel, taps=taps, nb=nb),
        out_shape=jax.ShapeDtypeStruct((N, Ho, Wo * OC), out_dtype),
        grid_spec=pltpu.PrefetchScalarGridSpec(
            num_scalar_prefetch=0,
            grid=(N // nb, n_wo_tiles),
            in_specs=[
                pl.BlockSpec((nb, stride, Hs, c_pad), lambda n, t: (n, 0, 0, 0)),
                pl.BlockSpec((K, c_pad, twoc), lambda n, t: (0, 0, t)),
            ],
            out_specs=pl.BlockSpec((nb, Ho, twoc), lambda n, t: (n, 0, t)),
            scratch_shapes=[pltpu.VMEM((nb, Ho, twoc), jnp.float32)],
        ),
        compiler_params=pltpu.CompilerParams(
            dimension_semantics=("parallel", "parallel"),
            vmem_limit_bytes=vmem_limit),
        cost_estimate=cost,
    )(x_ph, w_big)

    if out_layout == "tokens":
        return out.reshape(N, Ho * Wo, OC)
    out = out.reshape(N, Ho, Wo, OC)
    if out_layout == "NHWC":
        return out
    return jnp.transpose(out, (0, 3, 1, 2))     # NCHW to match the PyTorch output layout


# ---------------------------------------------------------------------------
# Pure-JAX reference (mirrors the PyTorch forward exactly) for verification.
# ---------------------------------------------------------------------------
def repconv_reference(x, weight, convmap_w, *, stride, padding, map_k):
    OC, IC, K, _ = weight.shape
    C2d = OC * IC
    delta = jax.lax.conv_general_dilated(
        weight.reshape(1, C2d, K, K), convmap_w, window_strides=(1, 1),
        padding=[(map_k // 2, map_k // 2)] * 2,
        dimension_numbers=("NCHW", "OIHW", "NCHW"), feature_group_count=C2d)
    kernel = weight + delta.reshape(OC, IC, K, K)
    return jax.lax.conv_general_dilated(
        x, kernel, window_strides=(stride, stride), padding=[(padding, padding)] * 2,
        dimension_numbers=("NCHW", "OIHW", "NCHW"))


def _run_case(*, N, IC, H, W, OC, K, stride, padding, map_k, **fwd_kwargs):
    key = jax.random.PRNGKey(0)
    kx, kwt, km = jax.random.split(key, 3)
    x = jax.random.normal(kx, (N, IC, H, W), dtype=jnp.float32)
    # The PyTorch buffer initializes to zeros; use random values so the computation is
    # non-trivial for the check.
    weight = 0.1 * jax.random.normal(kwt, (OC, IC, K, K), dtype=jnp.float32)
    convmap_w = 0.1 * jax.random.normal(km, (OC * IC, 1, map_k, map_k), dtype=jnp.float32)

    out = repconv_forward(x, weight, convmap_w, stride=stride, padding=padding,
                          map_k=map_k, **fwd_kwargs)
    out = jax.block_until_ready(out)

    ref = repconv_reference(x, weight, convmap_w, stride=stride, padding=padding, map_k=map_k)
    assert out.shape == ref.shape, (out.shape, ref.shape)
    err = float(jnp.max(jnp.abs(out - ref)))
    assert jnp.allclose(out, ref, rtol=2e-4, atol=2e-4), err


if __name__ == "__main__":
    # Case A: stride-1 RepConv.  Exercises batch folding (2 images / grid step, 2 steps for
    # the two v7x TensorCores) and wo tiling (2 lane-dense 128-wide output tiles).
    _run_case(N=4, IC=4, H=16, W=16, OC=16, K=3, stride=1, padding=1, map_k=3,
              images_per_block=2, wo_tile=8)
    # Case B: ConvEmbed-like config (kernel 7, stride 2, padding 3, Cin=3) at small spatial
    # size.  Exercises the phase-split stride-2 path and the padded contraction (48 -> 128).
    _run_case(N=2, IC=3, H=16, W=16, OC=16, K=7, stride=2, padding=3, map_k=3)
    print("KERNEL_OK")
</pallas_src>

<mosaic_0001>
module attributes {stable_mosaic.version = 11 : i64} {
  func.func @_repconv_kernel(%arg0: i32, %arg1: i32, %arg2: memref<2x1x16x128xf32, #tpu.memory_space<vmem>>, %arg3: memref<3x128x128xf32, #tpu.memory_space<vmem>>, %arg4: memref<2x16x128xf32, #tpu.memory_space<vmem>>, %arg5: memref<2x16x128xf32, #tpu.memory_space<vmem>>) attributes {dimension_semantics = [#tpu.dimension_semantics<parallel>, #tpu.dimension_semantics<parallel>], iteration_bounds = array<i64: 2, 2>, scalar_prefetch = 0 : i64, scratch_operands = 1 : i64, tpu.core_type = #tpu.core_type<tc>, window_params = [{transform_indices = @transform_0, window_bounds = array<i64: 2, 1, 16, 128>}, {transform_indices = @transform_1, window_bounds = array<i64: 3, 128, 128>}, {transform_indices = @transform_2, window_bounds = array<i64: 2, 16, 128>}]} {
    %cst = arith.constant 0.000000e+00 : f32
    %0 = vector.broadcast %cst : f32 to vector<2x16x128xf32>
    %c0 = arith.constant 0 : index
    %c0_0 = arith.constant 0 : index
    %c0_1 = arith.constant 0 : index
    %1 = vector.load %arg5[%c0, %c0_0, %c0_1] : memref<2x16x128xf32, #tpu.memory_space<vmem>>, vector<2x16x128xf32>
    tpu.vector_store %arg5[%c0, %c0_0, %c0_1], %0 {strides = array<i32>} : memref<2x16x128xf32, #tpu.memory_space<vmem>>, vector<2x16x128xf32>,
    %c0_2 = arith.constant 0 : index
    %c0_3 = arith.constant 0 : index
    %c0_4 = arith.constant 0 : index
    %2 = vector.load %arg3[%c0_2, %c0_3, %c0_4] : memref<3x128x128xf32, #tpu.memory_space<vmem>>, vector<1x128x128xf32>
    %3 = vector.shape_cast %2 : vector<1x128x128xf32> to vector<128x128xf32>
    %c0_5 = arith.constant 0 : index
    %c0_6 = arith.constant 0 : index
    %c0_7 = arith.constant 0 : index
    %c0_8 = arith.constant 0 : index
    %4 = vector.load %arg2[%c0_5, %c0_6, %c0_7, %c0_8] : memref<2x1x16x128xf32, #tpu.memory_space<vmem>>, vector<1x1x15x128xf32>
    %5 = vector.shape_cast %4 : vector<1x1x15x128xf32> to vector<15x128xf32>
    %c0_9 = arith.constant 0 : index
    %c1 = arith.constant 1 : index
    %c0_10 = arith.constant 0 : index
    %6 = vector.load %arg5[%c0_9, %c1, %c0_10] : memref<2x16x128xf32, #tpu.memory_space<vmem>>, vector<1x15x128xf32>
    %7 = vector.shape_cast %6 : vector<1x15x128xf32> to vector<15x128xf32>
    %cst_11 = arith.constant dense<0.000000e+00> : vector<15x128xf32>
    %8 = tpu.matmul %5, %3, %cst_11 {dimension_numbers = #tpu.dot_dimension_numbers<[1], [0], [0], [1], [0, 0, 1, 1], [], []>} : vector<15x128xf32>, vector<128x128xf32>, vector<15x128xf32> -> vector<15x128xf32>
    %9 = arith.addf %7, %8 : vector<15x128xf32>
    %c0_12 = arith.constant 0 : index
    %c1_13 = arith.constant 1 : index
    %c0_14 = arith.constant 0 : index
    %10 = vector.load %arg5[%c0_12, %c1_13, %c0_14] : memref<2x16x128xf32, #tpu.memory_space<vmem>>, vector<1x15x128xf32>
    %11 = vector.shape_cast %10 : vector<1x15x128xf32> to vector<15x128xf32>
    %12 = vector.shape_cast %9 : vector<15x128xf32> to vector<1x15x128xf32>
    tpu.vector_store %arg5[%c0_12, %c1_13, %c0_14], %12 {strides = array<i32>} : memref<2x16x128xf32, #tpu.memory_space<vmem>>, vector<1x15x128xf32>,
    %c1_15 = arith.constant 1 : index
    %c0_16 = arith.constant 0 : index
    %c0_17 = arith.constant 0 : index
    %c0_18 = arith.constant 0 : index
    %13 = vector.load %arg2[%c1_15, %c0_16, %c0_17, %c0_18] : memref<2x1x16x128xf32, #tpu.memory_space<vmem>>, vector<1x1x15x128xf32>
    %14 = vector.shape_cast %13 : vector<1x1x15x128xf32> to vector<15x128xf32>
    %c1_19 = arith.constant 1 : index
    %c1_20 = arith.constant 1 : index
    %c0_21 = arith.constant 0 : index
    %15 = vector.load %arg5[%c1_19, %c1_20, %c0_21] : memref<2x16x128xf32, #tpu.memory_space<vmem>>, vector<1x15x128xf32>
    %16 = vector.shape_cast %15 : vector<1x15x128xf32> to vector<15x128xf32>
    %cst_22 = arith.constant dense<0.000000e+00> : vector<15x128xf32>
    %17 = tpu.matmul %14, %3, %cst_22 {dimension_numbers = #tpu.dot_dimension_numbers<[1], [0], [0], [1], [0, 0, 1, 1], [], []>} : vector<15x128xf32>, vector<128x128xf32>, vector<15x128xf32> -> vector<15x128xf32>
    %18 = arith.addf %16, %17 : vector<15x128xf32>
    %c1_23 = arith.constant 1 : index
    %c1_24 = arith.constant 1 : index
    %c0_25 = arith.constant 0 : index
    %19 = vector.load %arg5[%c1_23, %c1_24, %c0_25] : memref<2x16x128xf32, #tpu.memory_space<vmem>>, vector<1x15x128xf32>
    %20 = vector.shape_cast %19 : vector<1x15x128xf32> to vector<15x128xf32>
    %21 = vector.shape_cast %18 : vector<15x128xf32> to vector<1x15x128xf32>
    tpu.vector_store %arg5[%c1_23, %c1_24, %c0_25], %21 {strides = array<i32>} : memref<2x16x128xf32, #tpu.memory_space<vmem>>, vector<1x15x128xf32>,
    %c1_26 = arith.constant 1 : index
    %c0_27 = arith.constant 0 : index
    %c0_28 = arith.constant 0 : index
    %22 = vector.load %arg3[%c1_26, %c0_27, %c0_28] : memref<3x128x128xf32, #tpu.memory_space<vmem>>, vector<1x128x128xf32>
    %23 = vector.shape_cast %22 : vector<1x128x128xf32> to vector<128x128xf32>
    %c0_29 = arith.constant 0 : index
    %c0_30 = arith.constant 0 : index
    %c0_31 = arith.constant 0 : index
    %c0_32 = arith.constant 0 : index
    %24 = vector.load %arg2[%c0_29, %c0_30, %c0_31, %c0_32] : memref<2x1x16x128xf32, #tpu.memory_space<vmem>>, vector<1x1x16x128xf32>
    %25 = vector.shape_cast %24 : vector<1x1x16x128xf32> to vector<16x128xf32>
    %c0_33 = arith.constant 0 : index
    %c0_34 = arith.constant 0 : index
    %c0_35 = arith.constant 0 : index
    %26 = vector.load %arg5[%c0_33, %c0_34, %c0_35] : memref<2x16x128xf32, #tpu.memory_space<vmem>>, vector<1x16x128xf32>
    %27 = vector.shape_cast %26 : vector<1x16x128xf32> to vector<16x128xf32>
    %cst_36 = arith.constant dense<0.000000e+00> : vector<16x128xf32>
    %28 = tpu.matmul %25, %23, %cst_36 {dimension_numbers = #tpu.dot_dimension_numbers<[1], [0], [0], [1], [0, 0, 1, 1], [], []>} : vector<16x128xf32>, vector<128x128xf32>, vector<16x128xf32> -> vector<16x128xf32>
    %29 = arith.addf %27, %28 : vector<16x128xf32>
    %c0_37 = arith.constant 0 : index
    %c0_38 = arith.constant 0 : index
    %c0_39 = arith.constant 0 : index
    %30 = vector.load %arg5[%c0_37, %c0_38, %c0_39] : memref<2x16x128xf32, #tpu.memory_space<vmem>>, vector<1x16x128xf32>
    %31 = vector.shape_cast %30 : vector<1x16x128xf32> to vector<16x128xf32>
    %32 = vector.shape_cast %29 : vector<16x128xf32> to vector<1x16x128xf32>
    tpu.vector_store %arg5[%c0_37, %c0_38, %c0_39], %32 {strides = array<i32>} : memref<2x16x128xf32, #tpu.memory_space<vmem>>, vector<1x16x128xf32>,
    %c1_40 = arith.constant 1 : index
    %c0_41 = arith.constant 0 : index
    %c0_42 = arith.constant 0 : index
    %c0_43 = arith.constant 0 : index
    %33 = vector.load %arg2[%c1_40, %c0_41, %c0_42, %c0_43] : memref<2x1x16x128xf32, #tpu.memory_space<vmem>>, vector<1x1x16x128xf32>
    %34 = vector.shape_cast %33 : vector<1x1x16x128xf32> to vector<16x128xf32>
    %c1_44 = arith.constant 1 : index
    %c0_45 = arith.constant 0 : index
    %c0_46 = arith.constant 0 : index
    %35 = vector.load %arg5[%c1_44, %c0_45, %c0_46] : memref<2x16x128xf32, #tpu.memory_space<vmem>>, vector<1x16x128xf32>
    %36 = vector.shape_cast %35 : vector<1x16x128xf32> to vector<16x128xf32>
    %cst_47 = arith.constant dense<0.000000e+00> : vector<16x128xf32>
    %37 = tpu.matmul %34, %23, %cst_47 {dimension_numbers = #tpu.dot_dimension_numbers<[1], [0], [0], [1], [0, 0, 1, 1], [], []>} : vector<16x128xf32>, vector<128x128xf32>, vector<16x128xf32> -> vector<16x128xf32>
    %38 = arith.addf %36, %37 : vector<16x128xf32>
    %c1_48 = arith.constant 1 : index
    %c0_49 = arith.constant 0 : index
    %c0_50 = arith.constant 0 : index
    %39 = vector.load %arg5[%c1_48, %c0_49, %c0_50] : memref<2x16x128xf32, #tpu.memory_space<vmem>>, vector<1x16x128xf32>
    %40 = vector.shape_cast %39 : vector<1x16x128xf32> to vector<16x128xf32>
    %41 = vector.shape_cast %38 : vector<16x128xf32> to vector<1x16x128xf32>
    tpu.vector_store %arg5[%c1_48, %c0_49, %c0_50], %41 {strides = array<i32>} : memref<2x16x128xf32, #tpu.memory_space<vmem>>, vector<1x16x128xf32>,
    %c2 = arith.constant 2 : index
    %c0_51 = arith.constant 0 : index
    %c0_52 = arith.constant 0 : index
    %42 = vector.load %arg3[%c2, %c0_51, %c0_52] : memref<3x128x128xf32, #tpu.memory_space<vmem>>, vector<1x128x128xf32>
    %43 = vector.shape_cast %42 : vector<1x128x128xf32> to vector<128x128xf32>
    %c0_53 = arith.constant 0 : index
    %c0_54 = arith.constant 0 : index
    %c1_55 = arith.constant 1 : index
    %c0_56 = arith.constant 0 : index
    %44 = vector.load %arg2[%c0_53, %c0_54, %c1_55, %c0_56] : memref<2x1x16x128xf32, #tpu.memory_space<vmem>>, vector<1x1x15x128xf32>
    %45 = vector.shape_cast %44 : vector<1x1x15x128xf32> to vector<15x128xf32>
    %c0_57 = arith.constant 0 : index
    %c0_58 = arith.constant 0 : index
    %c0_59 = arith.constant 0 : index
    %46 = vector.load %arg5[%c0_57, %c0_58, %c0_59] : memref<2x16x128xf32, #tpu.memory_space<vmem>>, vector<1x15x128xf32>
    %47 = vector.shape_cast %46 : vector<1x15x128xf32> to vector<15x128xf32>
    %cst_60 = arith.constant dense<0.000000e+00> : vector<15x128xf32>
    %48 = tpu.matmul %45, %43, %cst_60 {dimension_numbers = #tpu.dot_dimension_numbers<[1], [0], [0], [1], [0, 0, 1, 1], [], []>} : vector<15x128xf32>, vector<128x128xf32>, vector<15x128xf32> -> vector<15x128xf32>
    %49 = arith.addf %47, %48 : vector<15x128xf32>
    %c0_61 = arith.constant 0 : index
    %c0_62 = arith.constant 0 : index
    %c0_63 = arith.constant 0 : index
    %50 = vector.load %arg5[%c0_61, %c0_62, %c0_63] : memref<2x16x128xf32, #tpu.memory_space<vmem>>, vector<1x15x128xf32>
    %51 = vector.shape_cast %50 : vector<1x15x128xf32> to vector<15x128xf32>
    %52 = vector.shape_cast %49 : vector<15x128xf32> to vector<1x15x128xf32>
    tpu.vector_store %arg5[%c0_61, %c0_62, %c0_63], %52 {strides = array<i32>} : memref<2x16x128xf32, #tpu.memory_space<vmem>>, vector<1x15x128xf32>,
    %c1_64 = arith.constant 1 : index
    %c0_65 = arith.constant 0 : index
    %c1_66 = arith.constant 1 : index
    %c0_67 = arith.constant 0 : index
    %53 = vector.load %arg2[%c1_64, %c0_65, %c1_66, %c0_67] : memref<2x1x16x128xf32, #tpu.memory_space<vmem>>, vector<1x1x15x128xf32>
    %54 = vector.shape_cast %53 : vector<1x1x15x128xf32> to vector<15x128xf32>
    %c1_68 = arith.constant 1 : index
    %c0_69 = arith.constant 0 : index
    %c0_70 = arith.constant 0 : index
    %55 = vector.load %arg5[%c1_68, %c0_69, %c0_70] : memref<2x16x128xf32, #tpu.memory_space<vmem>>, vector<1x15x128xf32>
    %56 = vector.shape_cast %55 : vector<1x15x128xf32> to vector<15x128xf32>
    %cst_71 = arith.constant dense<0.000000e+00> : vector<15x128xf32>
    %57 = tpu.matmul %54, %43, %cst_71 {dimension_numbers = #tpu.dot_dimension_numbers<[1], [0], [0], [1], [0, 0, 1, 1], [], []>} : vector<15x128xf32>, vector<128x128xf32>, vector<15x128xf32> -> vector<15x128xf32>
    %58 = arith.addf %56, %57 : vector<15x128xf32>
    %c1_72 = arith.constant 1 : index
    %c0_73 = arith.constant 0 : index
    %c0_74 = arith.constant 0 : index
    %59 = vector.load %arg5[%c1_72, %c0_73, %c0_74] : memref<2x16x128xf32, #tpu.memory_space<vmem>>, vector<1x15x128xf32>
    %60 = vector.shape_cast %59 : vector<1x15x128xf32> to vector<15x128xf32>
    %61 = vector.shape_cast %58 : vector<15x128xf32> to vector<1x15x128xf32>
    tpu.vector_store %arg5[%c1_72, %c0_73, %c0_74], %61 {strides = array<i32>} : memref<2x16x128xf32, #tpu.memory_space<vmem>>, vector<1x15x128xf32>,
    %c0_75 = arith.constant 0 : index
    %c0_76 = arith.constant 0 : index
    %c0_77 = arith.constant 0 : index
    %62 = vector.load %arg5[%c0_75, %c0_76, %c0_77] : memref<2x16x128xf32, #tpu.memory_space<vmem>>, vector<2x16x128xf32>
    %c0_78 = arith.constant 0 : index
    %c0_79 = arith.constant 0 : index
    %c0_80 = arith.constant 0 : index
    %63 = vector.load %arg4[%c0_78, %c0_79, %c0_80] : memref<2x16x128xf32, #tpu.memory_space<vmem>>, vector<2x16x128xf32>
    tpu.vector_store %arg4[%c0_78, %c0_79, %c0_80], %62 {strides = array<i32>} : memref<2x16x128xf32, #tpu.memory_space<vmem>>, vector<2x16x128xf32>,
    return
  }
  func.func @transform_0(%arg0: i32, %arg1: i32) -> (i32, i32, i32, i32) {
    %c0_i32 = arith.constant 0 : i32
    %c0_i32_0 = arith.constant 0 : i32
    %c0_i32_1 = arith.constant 0 : i32
    %c0_i32_2 = arith.constant 0 : i32
    return %arg0, %c0_i32, %c0_i32_0, %c0_i32_1 : i32, i32, i32, i32
  }
  func.func @transform_1(%arg0: i32, %arg1: i32) -> (i32, i32, i32) {
    %c0_i32 = arith.constant 0 : i32
    %c0_i32_0 = arith.constant 0 : i32
    %c0_i32_1 = arith.constant 0 : i32
    return %c0_i32, %c0_i32_0, %arg1 : i32, i32, i32
  }
  func.func @transform_2(%arg0: i32, %arg1: i32) -> (i32, i32, i32) {
    %c0_i32 = arith.constant 0 : i32
    %c0_i32_0 = arith.constant 0 : i32
    return %arg0, %c0_i32, %arg1 : i32, i32, i32
  }
}

</mosaic_0001>

<llo_original>
// kernel: tpu_custom_call.1
$region0: #{tpu_custom_call.1}
  #allocation0 [shape = 'u32[]', space=smem, size = 0x4, offset = 0x4, fixed_abs, tag = 'smem constant byte address 0x4 - core index']
  #allocation1 [shape = 'u32[144,128]{1,0:T(1,128)}', space=vmem, size = 0x12000, scoped, tag = 'internal scratch']
  #allocation2 [shape = 'f32[2,16,128]{2,1,0:T(8,128)}', space=vmem, size = 0x4000, scoped, tag = 'scratch operand']
  %s0 = inlined_call_operand.hbm [shape: f32[4,1,16,128], index: 0, kind: input, shape index: {}]
  %s1 = inlined_call_operand.hbm [shape: f32[3,128,256], index: 1, kind: input, shape index: {}]
  %s2 = inlined_call_operand.hbm [shape: f32[4,16,256], index: 2, kind: output, shape index: {}]
  %s3 = sld [smem:[#allocation0]]
  $region49: #{tpu_custom_call.1} parent=0
    _
  %s5 = ssub.s32 1, %s3
  %s6 = scalar_select 0, %s5, %s3
  $region1: #{tpu_custom_call.1} parent=0
    #allocation3 [shape = 'u8[32768]{0}', space=vmem, size = 0x8000, scoped, tag = 'input window, operand 0']
    #allocation4 [shape = 's32[2]{0}', space=sflag, size = 0x8, scoped, tag = 'scoped memory for tpu_custom_call.1']
    #allocation5 [shape = 's32[2]{0}', space=sflag, size = 0x8, scoped, tag = 'scoped memory for tpu_custom_call.1']
    #allocation6 [shape = 'u8[393216]{0}', space=vmem, size = 0x60000, scoped, tag = 'input window, operand 1']
    #allocation7 [shape = 's32[2]{0}', space=sflag, size = 0x8, scoped, tag = 'scoped memory for tpu_custom_call.1']
    #allocation8 [shape = 'u8[32768]{0}', space=vmem, size = 0x8000, scoped, tag = 'output window, operand 0']
    %7 = vsyncpa [#allocation4], 0
    %s8 = scalar_lea.sflag [#allocation4], 1
    %9 = vsyncpa %s8, 0
    %10 = vsyncpa [#allocation7], 0
    %s11 = scalar_lea.sflag [#allocation7], 1
    %12 = vsyncpa %s11, 0
    %13 = vsyncpa [#allocation5], 0
    %s14 = scalar_lea.sflag [#allocation5], 1
    %15 = vsyncpa %s14, 0
    loop: start=0, step=1, limit=6
    $region2: #{tpu_custom_call.1} parent=1 // loop_pre_header
      _
    $region3: #{tpu_custom_call.1} parent=1 // loop_header
      %s17 = sphi 0, %s21
      %p18 = scmp.ge.s32.totalorder %s17, 6
      %s24 = sphi 0, %s36
      %s25 = sphi 0, %s32
      %s26 = sphi 0, %s24
      %s27 = sphi 0, %s25
      %s28 = sphi 0, %s26
      %s29 = sphi 0, %s27
      %s39 = sphi 0, %s41
      %s42 = sphi 0, %s39
      %s43 = sphi 0, %s42
      %s59 = sphi 0, %s43
      %s65 = sphi 0, %s67
      %s68 = sphi 0, %s65
      %s69 = sphi 0, %s68
      %s85 = sphi 0, %s69
      %s93 = sphi 0, %s95
      %s96 = sphi 0, %s93
      %s97 = sphi 0, %s96
      %s113 = sphi 0, %s97
    $region4: #{tpu_custom_call.1} parent=1 // loop_header_branch
      %20 = sbr.rel (%p18) target = $region8
    $region5: #{tpu_custom_call.1} parent=1 // loop_body
      %s22 = ssub.s32 %s17, 1
      %s23 = ssub.s32 %s17, 2
      %s30 = sadd.s32 1, %s25
      %p31 = scmp.ge.s32.totalorder %s30, 2
      %s32 = scalar_select %p31, 0, %s30
      %s33 = sadd.s32 1, %s24
      %s34 = scalar_select %p31, %s33, %s24
      %p35 = scmp.ge.s32.totalorder %s34, 2
      %s36 = scalar_select %p35, 0, %s34
      %s37 = ssub.s32 %s24, %s36
      %p38 = scmp.eq.s32.totalorder %s37, 0
      %s40 = sadd.s32 %s39, 1
      %s41 = scalar_select %p38, %s39, %s40
      %p44 = pneg %p38
      %p45 = scmp.eq.s32.totalorder %s17, 3
      %p46 = por %p44, %p45
      %p47 = scmp.ne.s32.totalorder %s39, %s42
      %p48 = scmp.eq.s32.totalorder %s17, 0
      %p49 = por %p47, %p48
      %p50 = scmp.ne.s32.totalorder %s39, %s42
      %p51 = scmp.eq.s32.totalorder %s22, 3
      %p52 = por %p50, %p51
      %p53 = scmp.ne.s32.totalorder %s42, %s43
      %p54 = scmp.eq.s32.totalorder %s22, 0
      %p55 = por %p53, %p54
      %p56 = scmp.ne.s32.totalorder %s42, %s43
      %p57 = scmp.eq.s32.totalorder %s23, 3
      %p58 = por %p56, %p57
      %p60 = scmp.ne.s32.totalorder %s43, %s59
      %p61 = scmp.eq.s32.totalorder %s23, 0
      %p62 = por %p60, %p61
      %s63 = ssub.s32 %s25, %s32
      %p64 = scmp.eq.s32.totalorder %s63, 0
      %s66 = sadd.s32 %s65, 1
      %s67 = scalar_select %p64, %s65, %s66
      %p70 = pneg %p64
      %p71 = scmp.eq.s32.totalorder %s17, 3
      %p72 = por %p70, %p71
      %p73 = scmp.ne.s32.totalorder %s65, %s68
      %p74 = scmp.eq.s32.totalorder %s17, 0
      %p75 = por %p73, %p74
      %p76 = scmp.ne.s32.totalorder %s65, %s68
      %p77 = scmp.eq.s32.totalorder %s22, 3
      %p78 = por %p76, %p77
      %p79 = scmp.ne.s32.totalorder %s68, %s69
      %p80 = scmp.eq.s32.totalorder %s22, 0
      %p81 = por %p79, %p80
      %p82 = scmp.ne.s32.totalorder %s68, %s69
      %p83 = scmp.eq.s32.totalorder %s23, 3
      %p84 = por %p82, %p83
      %p86 = scmp.ne.s32.totalorder %s69, %s85
      %p87 = scmp.eq.s32.totalorder %s23, 0
      %p88 = por %p86, %p87
      %s89 = ssub.s32 %s24, %s36
      %s90 = ssub.s32 %s25, %s32
      %s91 = sor.u32 %s89, %s90
      %p92 = scmp.eq.s32.totalorder %s91, 0
      %s94 = sadd.s32 %s93, 1
      %s95 = scalar_select %p92, %s93, %s94
      %p98 = pneg %p92
      %p99 = scmp.eq.s32.totalorder %s17, 3
      %p100 = por %p98, %p99
      %p101 = scmp.ne.s32.totalorder %s93, %s96
      %p102 = scmp.eq.s32.totalorder %s17, 0
      %p103 = por %p101, %p102
      %p104 = scmp.ne.s32.totalorder %s93, %s96
      %p105 = scmp.eq.s32.totalorder %s22, 3
      %p106 = por %p104, %p105
      %p107 = scmp.ne.s32.totalorder %s96, %s97
      %p108 = scmp.eq.s32.totalorder %s22, 0
      %p109 = por %p107, %p108
      %p110 = scmp.ne.s32.totalorder %s96, %s97
      %p111 = scmp.eq.s32.totalorder %s23, 3
      %p112 = por %p110, %p111
      %p114 = scmp.ne.s32.totalorder %s97, %s113
      %p115 = scmp.eq.s32.totalorder %s23, 0
      %p116 = por %p114, %p115
      %p117 = scmp.le.s32.totalorder 1, %s17
      %p118 = scmp.lt.s32.totalorder %s17, 5
      %p119 = pnand %p117, %p118
      %p120 = pneg %p119
      // Predicated region
      $region9: #{tpu_custom_call.1} parent=5 // pred_check
        _
      $region10: #{tpu_custom_call.1} parent=5 // pred_check_branch
        %122 = sbr.rel (%p119) target = $region12
      $region11: #{tpu_custom_call.1} parent=5 // pred_region
        %s123 = ssub.s32 %s17, 1
      $region12: #{tpu_custom_call.1} parent=5 // pred_fallthru
        _
      %p124 = scmp.lt.s32.totalorder %s17, 4
      // Predicated region
      $region13: #{tpu_custom_call.1} parent=5 // pred_check
        %p125 = pneg %p124
      $region14: #{tpu_custom_call.1} parent=5 // pred_check_branch
        %127 = sbr.rel (%p125) target = $region16
      $region15: #{tpu_custom_call.1} parent=5 // pred_region
        // Predicated region
        $region17: #{tpu_custom_call.1} parent=15 // pred_check
          %p128 = pneg %p49
        $region18: #{tpu_custom_call.1} parent=15 // pred_check_branch
          %130 = sbr.rel (%p128) target = $region20
        $region19: #{tpu_custom_call.1} parent=15 // pred_region
          %s131 = sand.u32 %s39, 1
          %s132 = scalar_lea.sflag [#allocation4], %s131
          %s133 = sand.u32 %s39, 1
          %s134 = smul.addr %s133, 32
          %s135 = scalar_lea.vmem [#allocation3], %s134
          %s136 = smul.u32 2, %s24
          %s138 = ssub.s32 512, 512
          %139 = vsyncadd %s132, %s138
          %s140 = smul.addr %s136, 2
          %s141 = smul.addr %s140, 128
          %s142 = scalar_lea.hbm %s0, %s141
          %s143 = sshll.u32 %s135, 4
          %s144 = int_to_ptr.vmem [resolvable:$true] %s143
          %149 = dma.hbm_to_vmem [thread:$0]  %s142, 512, %s144, %s132, 128, 128, 8
        $region20: #{tpu_custom_call.1} parent=15 // pred_fallthru
          _
        // Predicated region
        $region21: #{tpu_custom_call.1} parent=15 // pred_check
          %p150 = pneg %p75
        $region22: #{tpu_custom_call.1} parent=15 // pred_check_branch
          %152 = sbr.rel (%p150) target = $region24
        $region23: #{tpu_custom_call.1} parent=15 // pred_region
          %s153 = sand.u32 %s65, 1
          %s154 = scalar_lea.sflag [#allocation7], %s153
          %s155 = sand.u32 %s65, 1
          %s156 = smul.addr %s155, 384
          %s157 = scalar_lea.vmem [#allocation6], %s156
          %s159 = ssub.s32 6144, 6144
          %160 = vsyncadd %s154, %s159
          %s161 = smul.addr %s25, 128
          %s162 = scalar_lea.hbm %s1, %s161
          %s163 = sshll.u32 %s157, 4
          %s164 = int_to_ptr.vmem [resolvable:$true] %s163
          %169 = dma.hbm_to_vmem [thread:$0]  %s162, 6144, %s164, %s154, 256, 128, 8
        $region24: #{tpu_custom_call.1} parent=15 // pred_fallthru
          _
      $region16: #{tpu_custom_call.1} parent=5 // pred_fallthru
        _
      %p170 = scmp.le.s32.totalorder 1, %s17
      %p171 = scmp.lt.s32.totalorder %s17, 5
      %p172 = pnand %p170, %p171
      %p173 = pneg %p172
      // Predicated region
      $region25: #{tpu_custom_call.1} parent=5 // pred_check
        _
      $region26: #{tpu_custom_call.1} parent=5 // pred_check_branch
        %175 = sbr.rel (%p172) target = $region28
      $region27: #{tpu_custom_call.1} parent=5 // pred_region
        %s176 = ssub.s32 %s17, 1
        %s177 = sand.u32 %s42, 1
        %s178 = scalar_lea.sflag [#allocation4], %s177
        %s179 = sand.u32 %s42, 1
        %s180 = smul.addr %s179, 32
        %s181 = scalar_lea.vmem [#allocation3], %s180
        // Predicated region
        $region29: #{tpu_custom_call.1} parent=27 // pred_check
          %p182 = pneg %p55
        $region30: #{tpu_custom_call.1} parent=27 // pred_check_branch
          %184 = sbr.rel (%p182) target = $region32
        $region31: #{tpu_custom_call.1} parent=27 // pred_region
          %185 = dma.done %s178, 512
        $region32: #{tpu_custom_call.1} parent=27 // pred_fallthru
          _
        %s186 = sand.u32 %s68, 1
        %s187 = scalar_lea.sflag [#allocation7], %s186
        %s188 = sand.u32 %s68, 1
        %s189 = smul.addr %s188, 384
        %s190 = scalar_lea.vmem [#allocation6], %s189
        // Predicated region
        $region33: #{tpu_custom_call.1} parent=27 // pred_check
          %p191 = pneg %p81
        $region34: #{tpu_custom_call.1} parent=27 // pred_check_branch
          %193 = sbr.rel (%p191) target = $region36
        $region35: #{tpu_custom_call.1} parent=27 // pred_region
          %194 = dma.done %s187, 6144
        $region36: #{tpu_custom_call.1} parent=27 // pred_fallthru
          _
        %s195 = sand.u32 %s42, 1
        %s196 = scalar_lea.sflag [#allocation4], %s195
        %s197 = sand.u32 %s42, 1
        %s198 = smul.addr %s197, 32
        %s199 = scalar_lea.vmem [#allocation3], %s198
        %p200 = pneg %p55
        %p201 = pneg %p52
        %s202 = sand.u32 %s68, 1
        %s203 = scalar_lea.sflag [#allocation7], %s202
        %s204 = sand.u32 %s68, 1
        %s205 = smul.addr %s204, 384
        %s206 = scalar_lea.vmem [#allocation6], %s205
        %p207 = pneg %p81
        %p208 = pneg %p78
        %p209 = pneg %p109
        %p210 = pneg %p106
        %s211 = sand.u32 %s96, 1
        %s212 = scalar_lea.sflag [#allocation5], %s211
        %s213 = sand.u32 %s96, 1
        %s214 = smul.addr %s213, 32
        %s215 = scalar_lea.vmem [#allocation8], %s214
        %s216 = smul.u32 2, %s26
        %s217 = smul.u32 2, %s26
        %218 = vst [vmem:[#allocation2] sm:$0xff] 0.0
        %219 = vst [vmem:[#allocation2 + $0x8] sm:$0xff] 0.0
        %220 = vst [vmem:[#allocation2 + $0x10] sm:$0xff] 0.0
        %221 = vst [vmem:[#allocation2 + $0x18] sm:$0xff] 0.0
        %v222 = vld [vmem:[%s190] sm:$0xff]
        %v223 = vld [vmem:[%s190 + $0x8] sm:$0xff]
        %v224 = vld [vmem:[%s190 + $0x10] sm:$0xff]
        %v225 = vld [vmem:[%s190 + $0x18] sm:$0xff]
        %v226 = vld [vmem:[%s190 + $0x20] sm:$0xff]
        %v227 = vld [vmem:[%s190 + $0x28] sm:$0xff]
        %v228 = vld [vmem:[%s190 + $0x30] sm:$0xff]
        %v229 = vld [vmem:[%s190 + $0x38] sm:$0xff]
        %v230 = vld [vmem:[%s190 + $0x40] sm:$0xff]
        %v231 = vld [vmem:[%s190 + $0x48] sm:$0xff]
        %v232 = vld [vmem:[%s190 + $0x50] sm:$0xff]
        %v233 = vld [vmem:[%s190 + $0x58] sm:$0xff]
        %v234 = vld [vmem:[%s190 + $0x60] sm:$0xff]
        %v235 = vld [vmem:[%s190 + $0x68] sm:$0xff]
        %v236 = vld [vmem:[%s190 + $0x70] sm:$0xff]
        %v237 = vld [vmem:[%s190 + $0x78] sm:$0xff]
        %v238 = vld [vmem:[%s181] sm:$0xff]
        %v239 = vld [vmem:[%s181 + $0x8] sm:$0x7f]
        %v240 = vld [vmem:[#allocation2 + $0x1] sm:$0xff]
        %v241 = vld [vmem:[#allocation2 + $0x9] sm:$0x7f]
        %242 = vmatprep.subr.mxu0 0.0
        %243 = vmatpush1.msra.mxu0 %v222
        %244 = vmatprep.subr.mxu0 0.0
        %245 = vmatpush1.msra.mxu0 %v223
        %246 = vmatprep.subr.mxu0 0.0
        %247 = vmatpush1.msra.mxu0 %v224
        %248 = vmatprep.subr.mxu0 0.0
        %249 = vmatpush1.msra.mxu0 %v225
        %250 = vmatprep.subr.mxu0 0.0
        %251 = vmatpush1.msra.mxu0 %v226
        %252 = vmatprep.subr.mxu0 0.0
        %253 = vmatpush1.msra.mxu0 %v227
        %254 = vmatprep.subr.mxu0 0.0
        %255 = vmatpush1.msra.mxu0 %v228
        %256 = vmatprep.subr.mxu0 0.0
        %257 = vmatpush1.msra.mxu0 %v229
        %258 = vmatprep.subr.mxu0 0.0
        %259 = vmatpush1.msra.mxu0 %v230
        %260 = vmatprep.subr.mxu0 0.0
        %261 = vmatpush1.msra.mxu0 %v231
        %262 = vmatprep.subr.mxu0 0.0
        %263 = vmatpush1.msra.mxu0 %v232
        %264 = vmatprep.subr.mxu0 0.0
        %265 = vmatpush1.msra.mxu0 %v233
        %266 = vmatprep.subr.mxu0 0.0
        %267 = vmatpush1.msra.mxu0 %v234
        %268 = vmatprep.subr.mxu0 0.0
        %269 = vmatpush1.msra.mxu0 %v235
        %270 = vmatprep.subr.mxu0 0.0
        %271 = vmatpush1.msra.mxu0 %v236
        %272 = vmatprep.subr.mxu0 0.0
        %273 = vmatpush1.msra.mxu0 %v237
        %274 = vmatprep.subr.mxu0 0.0
        %275 = vmatpush1.msra.mxu0 0.0
        %276 = vmatprep.subr.mxu0 0.0
        %277 = vmatpush1.msra.mxu0 0.0
        %278 = vmatprep.subr.mxu0 0.0
        %279 = vmatpush1.msra.mxu0 0.0
        %280 = vmatprep.subr.mxu0 0.0
        %281 = vmatpush1.msra.mxu0 0.0
        %282 = vmatprep.subr.mxu0 0.0
        %283 = vmatpush1.msra.mxu0 0.0
        %284 = vmatprep.subr.mxu0 0.0
        %285 = vmatpush1.msra.mxu0 0.0
        %286 = vmatprep.subr.mxu0 0.0
        %287 = vmatpush1.msra.mxu0 0.0
        %288 = vmatprep.subr.mxu0 0.0
        %289 = vmatpush1.msra.mxu0 0.0
        %290 = vmatprep.subr.mxu0 0.0
        %291 = vmatpush1.msra.mxu0 0.0
        %292 = vmatprep.subr.mxu0 0.0
        %293 = vmatpush1.msra.mxu0 0.0
        %294 = vmatprep.subr.mxu0 0.0
        %295 = vmatpush1.msra.mxu0 0.0
        %296 = vmatprep.subr.mxu0 0.0
        %297 = vmatpush1.msra.mxu0 0.0
        %298 = vmatprep.subr.mxu0 0.0
        %299 = vmatpush1.msra.mxu0 0.0
        %300 = vmatprep.subr.mxu0 0.0
        %301 = vmatpush1.msra.mxu0 0.0
        %302 = vmatprep.subr.mxu0 0.0
        %303 = vmatpush1.msra.mxu0 0.0
        %304 = vmatprep.subr.mxu0 0.0
        %305 = vmatpush1.msra.mxu0 0.0
        %306 = vmatprep.mubr.f32.mxu0 0.0
        %307 = vmatmul.mubr.f32.gmra.mrb[0].mxu0 %v238
        %v308 = vpop.f32.mrb[0].mxu0
        %v309 = vadd.f32 0.0, %v308
        %v310 = vpop.f32.mrb[0].mxu0
        %311 = vmatprep.mubr.f32.mxu0 0.0
        %312 = vmatmul.mubr.f32.gmra.mrb[0].mxu0 %v239
        %v313 = vpop.f32.mrb[0].mxu0
        %v314 = vadd.f32 0.0, %v313
        %v315 = vpop.f32.mrb[0].mxu0
        %316 = vdwg.mxu0
        %v317 = vadd.f32 %v240, %v309
        %v318 = vadd.f32 %v241, %v314
        %319 = vst [vmem:[#allocation2 + $0x1] sm:$0xff] %v317
        %320 = vst [vmem:[#allocation2 + $0x9] sm:$0x7f] %v318
        %s321 = scalar_lea.vmem %s181, 16 [#allocation3]
        %v322 = vld [vmem:[%s321] sm:$0xff]
        %v323 = vld [vmem:[%s321 + $0x8] sm:$0x7f]
        %s324 = scalar_lea.vmem [#allocation2], 16
        %v325 = vld [vmem:[%s324 + $0x1] sm:$0xff]
        %v326 = vld [vmem:[%s324 + $0x9] sm:$0x7f]
        %327 = vmatprep.subr.mxu0 0.0
        %328 = vmatpush1.msra.mxu0 %v222
        %329 = vmatprep.subr.mxu0 0.0
        %330 = vmatpush1.msra.mxu0 %v223
        %331 = vmatprep.subr.mxu0 0.0
        %332 = vmatpush1.msra.mxu0 %v224
        %333 = vmatprep.subr.mxu0 0.0
        %334 = vmatpush1.msra.mxu0 %v225
        %335 = vmatprep.subr.mxu0 0.0
        %336 = vmatpush1.msra.mxu0 %v226
        %337 = vmatprep.subr.mxu0 0.0
        %338 = vmatpush1.msra.mxu0 %v227
        %339 = vmatprep.subr.mxu0 0.0
        %340 = vmatpush1.msra.mxu0 %v228
        %341 = vmatprep.subr.mxu0 0.0
        %342 = vmatpush1.msra.mxu0 %v229
        %343 = vmatprep.subr.mxu0 0.0
        %344 = vmatpush1.msra.mxu0 %v230
        %345 = vmatprep.subr.mxu0 0.0
        %346 = vmatpush1.msra.mxu0 %v231
        %347 = vmatprep.subr.mxu0 0.0
        %348 = vmatpush1.msra.mxu0 %v232
        %349 = vmatprep.subr.mxu0 0.0
        %350 = vmatpush1.msra.mxu0 %v233
        %351 = vmatprep.subr.mxu0 0.0
        %352 = vmatpush1.msra.mxu0 %v234
        %353 = vmatprep.subr.mxu0 0.0
        %354 = vmatpush1.msra.mxu0 %v235
        %355 = vmatprep.subr.mxu0 0.0
        %356 = vmatpush1.msra.mxu0 %v236
        %357 = vmatprep.subr.mxu0 0.0
        %358 = vmatpush1.msra.mxu0 %v237
        %359 = vmatprep.subr.mxu0 0.0
        %360 = vmatpush1.msra.mxu0 0.0
        %361 = vmatprep.subr.mxu0 0.0
        %362 = vmatpush1.msra.mxu0 0.0
        %363 = vmatprep.subr.mxu0 0.0
        %364 = vmatpush1.msra.mxu0 0.0
        %365 = vmatprep.subr.mxu0 0.0
        %366 = vmatpush1.msra.mxu0 0.0
        %367 = vmatprep.subr.mxu0 0.0
        %368 = vmatpush1.msra.mxu0 0.0
        %369 = vmatprep.subr.mxu0 0.0
        %370 = vmatpush1.msra.mxu0 0.0
        %371 = vmatprep.subr.mxu0 0.0
        %372 = vmatpush1.msra.mxu0 0.0
        %373 = vmatprep.subr.mxu0 0.0
        %374 = vmatpush1.msra.mxu0 0.0
        %375 = vmatprep.subr.mxu0 0.0
        %376 = vmatpush1.msra.mxu0 0.0
        %377 = vmatprep.subr.mxu0 0.0
        %378 = vmatpush1.msra.mxu0 0.0
        %379 = vmatprep.subr.mxu0 0.0
        %380 = vmatpush1.msra.mxu0 0.0
        %381 = vmatprep.subr.mxu0 0.0
        %382 = vmatpush1.msra.mxu0 0.0
        %383 = vmatprep.subr.mxu0 0.0
        %384 = vmatpush1.msra.mxu0 0.0
        %385 = vmatprep.subr.mxu0 0.0
        %386 = vmatpush1.msra.mxu0 0.0
        %387 = vmatprep.subr.mxu0 0.0
        %388 = vmatpush1.msra.mxu0 0.0
        %389 = vmatprep.subr.mxu0 0.0
        %390 = vmatpush1.msra.mxu0 0.0
        %391 = vmatprep.mubr.f32.mxu0 0.0
        %392 = vmatmul.mubr.f32.gmra.mrb[0].mxu0 %v322
        %v393 = vpop.f32.mrb[0].mxu0
        %v394 = vadd.f32 0.0, %v393
        %v395 = vpop.f32.mrb[0].mxu0
        %396 = vmatprep.mubr.f32.mxu0 0.0
        %397 = vmatmul.mubr.f32.gmra.mrb[0].mxu0 %v323
        %v398 = vpop.f32.mrb[0].mxu0
        %v399 = vadd.f32 0.0, %v398
        %v400 = vpop.f32.mrb[0].mxu0
        %401 = vdwg.mxu0
        %v402 = vadd.f32 %v325, %v394
        %v403 = vadd.f32 %v326, %v399
        %404 = vst [vmem:[%s324 + $0x1] sm:$0xff] %v402
        %405 = vst [vmem:[%s324 + $0x9] sm:$0x7f] %v403
        %s406 = scalar_lea.vmem %s190, 128 [#allocation6]
        %v407 = vld [vmem:[%s406] sm:$0xff]
        %v408 = vld [vmem:[%s406 + $0x8] sm:$0xff]
        %v409 = vld [vmem:[%s406 + $0x10] sm:$0xff]
        %v410 = vld [vmem:[%s406 + $0x18] sm:$0xff]
        %v411 = vld [vmem:[%s406 + $0x20] sm:$0xff]
        %v412 = vld [vmem:[%s406 + $0x28] sm:$0xff]
        %v413 = vld [vmem:[%s406 + $0x30] sm:$0xff]
        %v414 = vld [vmem:[%s406 + $0x38] sm:$0xff]
        %v415 = vld [vmem:[%s406 + $0x40] sm:$0xff]
        %v416 = vld [vmem:[%s406 + $0x48] sm:$0xff]
        %v417 = vld [vmem:[%s406 + $0x50] sm:$0xff]
        %v418 = vld [vmem:[%s406 + $0x58] sm:$0xff]
        %v419 = vld [vmem:[%s406 + $0x60] sm:$0xff]
        %v420 = vld [vmem:[%s406 + $0x68] sm:$0xff]
        %v421 = vld [vmem:[%s406 + $0x70] sm:$0xff]
        %v422 = vld [vmem:[%s406 + $0x78] sm:$0xff]
        %v423 = vld [vmem:[%s181] sm:$0xff]
        %v424 = vld [vmem:[%s181 + $0x8] sm:$0xff]
        %v425 = vld [vmem:[#allocation2] sm:$0xff]
        %v426 = vld [vmem:[#allocation2 + $0x8] sm:$0xff]
        %427 = vmatprep.subr.mxu0 0.0
        %428 = vmatpush1.msra.mxu0 %v407
        %429 = vmatprep.subr.mxu0 0.0
        %430 = vmatpush1.msra.mxu0 %v408
        %431 = vmatprep.subr.mxu0 0.0
        %432 = vmatpush1.msra.mxu0 %v409
        %433 = vmatprep.subr.mxu0 0.0
        %434 = vmatpush1.msra.mxu0 %v410
        %435 = vmatprep.subr.mxu0 0.0
        %436 = vmatpush1.msra.mxu0 %v411
        %437 = vmatprep.subr.mxu0 0.0
        %438 = vmatpush1.msra.mxu0 %v412
        %439 = vmatprep.subr.mxu0 0.0
        %440 = vmatpush1.msra.mxu0 %v413
        %441 = vmatprep.subr.mxu0 0.0
        %442 = vmatpush1.msra.mxu0 %v414
        %443 = vmatprep.subr.mxu0 0.0
        %444 = vmatpush1.msra.mxu0 %v415
        %445 = vmatprep.subr.mxu0 0.0
        %446 = vmatpush1.msra.mxu0 %v416
        %447 = vmatprep.subr.mxu0 0.0
        %448 = vmatpush1.msra.mxu0 %v417
        %449 = vmatprep.subr.mxu0 0.0
        %450 = vmatpush1.msra.mxu0 %v418
        %451 = vmatprep.subr.mxu0 0.0
        %452 = vmatpush1.msra.mxu0 %v419
        %453 = vmatprep.subr.mxu0 0.0
        %454 = vmatpush1.msra.mxu0 %v420
        %455 = vmatprep.subr.mxu0 0.0
        %456 = vmatpush1.msra.mxu0 %v421
        %457 = vmatprep.subr.mxu0 0.0
        %458 = vmatpush1.msra.mxu0 %v422
        %459 = vmatprep.subr.mxu0 0.0
        %460 = vmatpush1.msra.mxu0 0.0
        %461 = vmatprep.subr.mxu0 0.0
        %462 = vmatpush1.msra.mxu0 0.0
        %463 = vmatprep.subr.mxu0 0.0
        %464 = vmatpush1.msra.mxu0 0.0
        %465 = vmatprep.subr.mxu0 0.0
        %466 = vmatpush1.msra.mxu0 0.0
        %467 = vmatprep.subr.mxu0 0.0
        %468 = vmatpush1.msra.mxu0 0.0
        %469 = vmatprep.subr.mxu0 0.0
        %470 = vmatpush1.msra.mxu0 0.0
        %471 = vmatprep.subr.mxu0 0.0
        %472 = vmatpush1.msra.mxu0 0.0
        %473 = vmatprep.subr.mxu0 0.0
        %474 = vmatpush1.msra.mxu0 0.0
        %475 = vmatprep.subr.mxu0 0.0
        %476 = vmatpush1.msra.mxu0 0.0
        %477 = vmatprep.subr.mxu0 0.0
        %478 = vmatpush1.msra.mxu0 0.0
        %479 = vmatprep.subr.mxu0 0.0
        %480 = vmatpush1.msra.mxu0 0.0
        %481 = vmatprep.subr.mxu0 0.0
        %482 = vmatpush1.msra.mxu0 0.0
        %483 = vmatprep.subr.mxu0 0.0
        %484 = vmatpush1.msra.mxu0 0.0
        %485 = vmatprep.subr.mxu0 0.0
        %486 = vmatpush1.msra.mxu0 0.0
        %487 = vmatprep.subr.mxu0 0.0
        %488 = vmatpush1.msra.mxu0 0.0
        %489 = vmatprep.subr.mxu0 0.0
        %490 = vmatpush1.msra.mxu0 0.0
        %491 = vmatprep.mubr.f32.mxu0 0.0
        %492 = vmatmul.mubr.f32.gmra.mrb[0].mxu0 %v423
        %v493 = vpop.f32.mrb[0].mxu0
        %v494 = vadd.f32 0.0, %v493
        %v495 = vpop.f32.mrb[0].mxu0
        %496 = vmatprep.mubr.f32.mxu0 0.0
        %497 = vmatmul.mubr.f32.gmra.mrb[0].mxu0 %v424
        %v498 = vpop.f32.mrb[0].mxu0
        %v499 = vadd.f32 0.0, %v498
        %v500 = vpop.f32.mrb[0].mxu0
        %501 = vdwg.mxu0
        %v502 = vadd.f32 %v425, %v494
        %v503 = vadd.f32 %v426, %v499
        %504 = vst [vmem:[#allocation2] sm:$0xff] %v502
        %505 = vst [vmem:[#allocation2 + $0x8] sm:$0xff] %v503
        %v506 = vld [vmem:[%s321] sm:$0xff]
        %v507 = vld [vmem:[%s321 + $0x8] sm:$0xff]
        %v508 = vld [vmem:[%s324] sm:$0xff]
        %v509 = vld [vmem:[%s324 + $0x8] sm:$0xff]
        %510 = vmatprep.subr.mxu0 0.0
        %511 = vmatpush1.msra.mxu0 %v407
        %512 = vmatprep.subr.mxu0 0.0
        %513 = vmatpush1.msra.mxu0 %v408
        %514 = vmatprep.subr.mxu0 0.0
        %515 = vmatpush1.msra.mxu0 %v409
        %516 = vmatprep.subr.mxu0 0.0
        %517 = vmatpush1.msra.mxu0 %v410
        %518 = vmatprep.subr.mxu0 0.0
        %519 = vmatpush1.msra.mxu0 %v411
        %520 = vmatprep.subr.mxu0 0.0
        %521 = vmatpush1.msra.mxu0 %v412
        %522 = vmatprep.subr.mxu0 0.0
        %523 = vmatpush1.msra.mxu0 %v413
        %524 = vmatprep.subr.mxu0 0.0
        %525 = vmatpush1.msra.mxu0 %v414
        %526 = vmatprep.subr.mxu0 0.0
        %527 = vmatpush1.msra.mxu0 %v415
        %528 = vmatprep.subr.mxu0 0.0
        %529 = vmatpush1.msra.mxu0 %v416
        %530 = vmatprep.subr.mxu0 0.0
        %531 = vmatpush1.msra.mxu0 %v417
        %532 = vmatprep.subr.mxu0 0.0
        %533 = vmatpush1.msra.mxu0 %v418
        %534 = vmatprep.subr.mxu0 0.0
        %535 = vmatpush1.msra.mxu0 %v419
        %536 = vmatprep.subr.mxu0 0.0
        %537 = vmatpush1.msra.mxu0 %v420
        %538 = vmatprep.subr.mxu0 0.0
        %539 = vmatpush1.msra.mxu0 %v421
        %540 = vmatprep.subr.mxu0 0.0
        %541 = vmatpush1.msra.mxu0 %v422
        %542 = vmatprep.subr.mxu0 0.0
        %543 = vmatpush1.msra.mxu0 0.0
        %544 = vmatprep.subr.mxu0 0.0
        %545 = vmatpush1.msra.mxu0 0.0
        %546 = vmatprep.subr.mxu0 0.0
        %547 = vmatpush1.msra.mxu0 0.0
        %548 = vmatprep.subr.mxu0 0.0
        %549 = vmatpush1.msra.mxu0 0.0
        %550 = vmatprep.subr.mxu0 0.0
        %551 = vmatpush1.msra.mxu0 0.0
        %552 = vmatprep.subr.mxu0 0.0
        %553 = vmatpush1.msra.mxu0 0.0
        %554 = vmatprep.subr.mxu0 0.0
        %555 = vmatpush1.msra.mxu0 0.0
        %556 = vmatprep.subr.mxu0 0.0
        %557 = vmatpush1.msra.mxu0 0.0
        %558 = vmatprep.subr.mxu0 0.0
        %559 = vmatpush1.msra.mxu0 0.0
        %560 = vmatprep.subr.mxu0 0.0
        %561 = vmatpush1.msra.mxu0 0.0
        %562 = vmatprep.subr.mxu0 0.0
        %563 = vmatpush1.msra.mxu0 0.0
        %564 = vmatprep.subr.mxu0 0.0
        %565 = vmatpush1.msra.mxu0 0.0
        %566 = vmatprep.subr.mxu0 0.0
        %567 = vmatpush1.msra.mxu0 0.0
        %568 = vmatprep.subr.mxu0 0.0
        %569 = vmatpush1.msra.mxu0 0.0
        %570 = vmatprep.subr.mxu0 0.0
        %571 = vmatpush1.msra.mxu0 0.0
        %572 = vmatprep.subr.mxu0 0.0
        %573 = vmatpush1.msra.mxu0 0.0
        %574 = vmatprep.mubr.f32.mxu0 0.0
        %575 = vmatmul.mubr.f32.gmra.mrb[0].mxu0 %v506
        %v576 = vpop.f32.mrb[0].mxu0
        %v577 = vadd.f32 0.0, %v576
        %v578 = vpop.f32.mrb[0].mxu0
        %579 = vmatprep.mubr.f32.mxu0 0.0
        %580 = vmatmul.mubr.f32.gmra.mrb[0].mxu0 %v507
        %v581 = vpop.f32.mrb[0].mxu0
        %v582 = vadd.f32 0.0, %v581
        %v583 = vpop.f32.mrb[0].mxu0
        %584 = vdwg.mxu0
        %v585 = vadd.f32 %v508, %v577
        %v586 = vadd.f32 %v509, %v582
        %587 = vst [vmem:[%s324] sm:$0xff] %v585
        %588 = vst [vmem:[%s324 + $0x8] sm:$0xff] %v586
        %s589 = scalar_lea.vmem %s190, 256 [#allocation6]
        %v590 = vld [vmem:[%s589] sm:$0xff]
        %v591 = vld [vmem:[%s589 + $0x8] sm:$0xff]
        %v592 = vld [vmem:[%s589 + $0x10] sm:$0xff]
        %v593 = vld [vmem:[%s589 + $0x18] sm:$0xff]
        %v594 = vld [vmem:[%s589 + $0x20] sm:$0xff]
        %v595 = vld [vmem:[%s589 + $0x28] sm:$0xff]
        %v596 = vld [vmem:[%s589 + $0x30] sm:$0xff]
        %v597 = vld [vmem:[%s589 + $0x38] sm:$0xff]
        %v598 = vld [vmem:[%s589 + $0x40] sm:$0xff]
        %v599 = vld [vmem:[%s589 + $0x48] sm:$0xff]
        %v600 = vld [vmem:[%s589 + $0x50] sm:$0xff]
        %v601 = vld [vmem:[%s589 + $0x58] sm:$0xff]
        %v602 = vld [vmem:[%s589 + $0x60] sm:$0xff]
        %v603 = vld [vmem:[%s589 + $0x68] sm:$0xff]
        %v604 = vld [vmem:[%s589 + $0x70] sm:$0xff]
        %v605 = vld [vmem:[%s589 + $0x78] sm:$0xff]
        %v606 = vld [vmem:[%s181 + $0x1] sm:$0xff]
        %v607 = vld [vmem:[%s181 + $0x9] sm:$0x7f]
        %v608 = vld [vmem:[#allocation2] sm:$0xff]
        %v609 = vld [vmem:[#allocation2 + $0x8] sm:$0x7f]
        %610 = vmatprep.subr.mxu0 0.0
        %611 = vmatpush1.msra.mxu0 %v590
        %612 = vmatprep.subr.mxu0 0.0
        %613 = vmatpush1.msra.mxu0 %v591
        %614 = vmatprep.subr.mxu0 0.0
        %615 = vmatpush1.msra.mxu0 %v592
        %616 = vmatprep.subr.mxu0 0.0
        %617 = vmatpush1.msra.mxu0 %v593
        %618 = vmatprep.subr.mxu0 0.0
        %619 = vmatpush1.msra.mxu0 %v594
        %620 = vmatprep.subr.mxu0 0.0
        %621 = vmatpush1.msra.mxu0 %v595
        %622 = vmatprep.subr.mxu0 0.0
        %623 = vmatpush1.msra.mxu0 %v596
        %624 = vmatprep.subr.mxu0 0.0
        %625 = vmatpush1.msra.mxu0 %v597
        %626 = vmatprep.subr.mxu0 0.0
        %627 = vmatpush1.msra.mxu0 %v598
        %628 = vmatprep.subr.mxu0 0.0
        %629 = vmatpush1.msra.mxu0 %v599
        %630 = vmatprep.subr.mxu0 0.0
        %631 = vmatpush1.msra.mxu0 %v600
        %632 = vmatprep.subr.mxu0 0.0
        %633 = vmatpush1.msra.mxu0 %v601
        %634 = vmatprep.subr.mxu0 0.0
        %635 = vmatpush1.msra.mxu0 %v602
        %636 = vmatprep.subr.mxu0 0.0
        %637 = vmatpush1.msra.mxu0 %v603
        %638 = vmatprep.subr.mxu0 0.0
        %639 = vmatpush1.msra.mxu0 %v604
        %640 = vmatprep.subr.mxu0 0.0
        %641 = vmatpush1.msra.mxu0 %v605
        %642 = vmatprep.subr.mxu0 0.0
        %643 = vmatpush1.msra.mxu0 0.0
        %644 = vmatprep.subr.mxu0 0.0
        %645 = vmatpush1.msra.mxu0 0.0
        %646 = vmatprep.subr.mxu0 0.0
        %647 = vmatpush1.msra.mxu0 0.0
        %648 = vmatprep.subr.mxu0 0.0
        %649 = vmatpush1.msra.mxu0 0.0
        %650 = vmatprep.subr.mxu0 0.0
        %651 = vmatpush1.msra.mxu0 0.0
        %652 = vmatprep.subr.mxu0 0.0
        %653 = vmatpush1.msra.mxu0 0.0
        %654 = vmatprep.subr.mxu0 0.0
        %655 = vmatpush1.msra.mxu0 0.0
        %656 = vmatprep.subr.mxu0 0.0
        %657 = vmatpush1.msra.mxu0 0.0
        %658 = vmatprep.subr.mxu0 0.0
        %659 = vmatpush1.msra.mxu0 0.0
        %660 = vmatprep.subr.mxu0 0.0
        %661 = vmatpush1.msra.mxu0 0.0
        %662 = vmatprep.subr.mxu0 0.0
        %663 = vmatpush1.msra.mxu0 0.0
        %664 = vmatprep.subr.mxu0 0.0
        %665 = vmatpush1.msra.mxu0 0.0
        %666 = vmatprep.subr.mxu0 0.0
        %667 = vmatpush1.msra.mxu0 0.0
        %668 = vmatprep.subr.mxu0 0.0
        %669 = vmatpush1.msra.mxu0 0.0
        %670 = vmatprep.subr.mxu0 0.0
        %671 = vmatpush1.msra.mxu0 0.0
        %672 = vmatprep.subr.mxu0 0.0
        %673 = vmatpush1.msra.mxu0 0.0
        %674 = vmatprep.mubr.f32.mxu0 0.0
        %675 = vmatmul.mubr.f32.gmra.mrb[0].mxu0 %v606
        %v676 = vpop.f32.mrb[0].mxu0
        %v677 = vadd.f32 0.0, %v676
        %v678 = vpop.f32.mrb[0].mxu0
        %679 = vmatprep.mubr.f32.mxu0 0.0
        %680 = vmatmul.mubr.f32.gmra.mrb[0].mxu0 %v607
        %v681 = vpop.f32.mrb[0].mxu0
        %v682 = vadd.f32 0.0, %v681
        %v683 = vpop.f32.mrb[0].mxu0
        %684 = vdwg.mxu0
        %v685 = vadd.f32 %v608, %v677
        %v686 = vadd.f32 %v609, %v682
        %687 = vst [vmem:[#allocation2] sm:$0xff] %v685
        %688 = vst [vmem:[#allocation2 + $0x8] sm:$0x7f] %v686
        %v689 = vld [vmem:[%s321 + $0x1] sm:$0xff]
        %v690 = vld [vmem:[%s321 + $0x9] sm:$0x7f]
        %v691 = vld [vmem:[%s324] sm:$0xff]
        %v692 = vld [vmem:[%s324 + $0x8] sm:$0x7f]
        %693 = vmatprep.subr.mxu0 0.0
        %694 = vmatpush1.msra.mxu0 %v590
        %695 = vmatprep.subr.mxu0 0.0
        %696 = vmatpush1.msra.mxu0 %v591
        %697 = vmatprep.subr.mxu0 0.0
        %698 = vmatpush1.msra.mxu0 %v592
        %699 = vmatprep.subr.mxu0 0.0
        %700 = vmatpush1.msra.mxu0 %v593
        %701 = vmatprep.subr.mxu0 0.0
        %702 = vmatpush1.msra.mxu0 %v594
        %703 = vmatprep.subr.mxu0 0.0
        %704 = vmatpush1.msra.mxu0 %v595
        %705 = vmatprep.subr.mxu0 0.0
        %706 = vmatpush1.msra.mxu0 %v596
        %707 = vmatprep.subr.mxu0 0.0
        %708 = vmatpush1.msra.mxu0 %v597
        %709 = vmatprep.subr.mxu0 0.0
        %710 = vmatpush1.msra.mxu0 %v598
        %711 = vmatprep.subr.mxu0 0.0
        %712 = vmatpush1.msra.mxu0 %v599
        %713 = vmatprep.subr.mxu0 0.0
        %714 = vmatpush1.msra.mxu0 %v600
        %715 = vmatprep.subr.mxu0 0.0
        %716 = vmatpush1.msra.mxu0 %v601
        %717 = vmatprep.subr.mxu0 0.0
        %718 = vmatpush1.msra.mxu0 %v602
        %719 = vmatprep.subr.mxu0 0.0
        %720 = vmatpush1.msra.mxu0 %v603
        %721 = vmatprep.subr.mxu0 0.0
        %722 = vmatpush1.msra.mxu0 %v604
        %723 = vmatprep.subr.mxu0 0.0
        %724 = vmatpush1.msra.mxu0 %v605
        %725 = vmatprep.subr.mxu0 0.0
        %726 = vmatpush1.msra.mxu0 0.0
        %727 = vmatprep.subr.mxu0 0.0
        %728 = vmatpush1.msra.mxu0 0.0
        %729 = vmatprep.subr.mxu0 0.0
        %730 = vmatpush1.msra.mxu0 0.0
        %731 = vmatprep.subr.mxu0 0.0
        %732 = vmatpush1.msra.mxu0 0.0
        %733 = vmatprep.subr.mxu0 0.0
        %734 = vmatpush1.msra.mxu0 0.0
        %735 = vmatprep.subr.mxu0 0.0
        %736 = vmatpush1.msra.mxu0 0.0
        %737 = vmatprep.subr.mxu0 0.0
        %738 = vmatpush1.msra.mxu0 0.0
        %739 = vmatprep.subr.mxu0 0.0
        %740 = vmatpush1.msra.mxu0 0.0
        %741 = vmatprep.subr.mxu0 0.0
        %742 = vmatpush1.msra.mxu0 0.0
        %743 = vmatprep.subr.mxu0 0.0
        %744 = vmatpush1.msra.mxu0 0.0
        %745 = vmatprep.subr.mxu0 0.0
        %746 = vmatpush1.msra.mxu0 0.0
        %747 = vmatprep.subr.mxu0 0.0
        %748 = vmatpush1.msra.mxu0 0.0
        %749 = vmatprep.subr.mxu0 0.0
        %750 = vmatpush1.msra.mxu0 0.0
        %751 = vmatprep.subr.mxu0 0.0
        %752 = vmatpush1.msra.mxu0 0.0
        %753 = vmatprep.subr.mxu0 0.0
        %754 = vmatpush1.msra.mxu0 0.0
        %755 = vmatprep.subr.mxu0 0.0
        %756 = vmatpush1.msra.mxu0 0.0
        %757 = vmatprep.mubr.f32.mxu0 0.0
        %758 = vmatmul.mubr.f32.gmra.mrb[0].mxu0 %v689
        %v759 = vpop.f32.mrb[0].mxu0
        %v760 = vadd.f32 0.0, %v759
        %v761 = vpop.f32.mrb[0].mxu0
        %762 = vmatprep.mubr.f32.mxu0 0.0
        %763 = vmatmul.mubr.f32.gmra.mrb[0].mxu0 %v690
        %v764 = vpop.f32.mrb[0].mxu0
        %v765 = vadd.f32 0.0, %v764
        %v766 = vpop.f32.mrb[0].mxu0
        %767 = vdwg.mxu0
        %v768 = vadd.f32 %v691, %v760
        %v769 = vadd.f32 %v692, %v765
        %770 = vst [vmem:[%s324] sm:$0xff] %v768
        %771 = vst [vmem:[%s324 + $0x8] sm:$0x7f] %v769
        %v772 = vld [vmem:[#allocation2] sm:$0xff]
        %v773 = vld [vmem:[#allocation2 + $0x8] sm:$0xff]
        %v774 = vld [vmem:[#allocation2 + $0x10] sm:$0xff]
        %v775 = vld [vmem:[#allocation2 + $0x18] sm:$0xff]
        %776 = vst [vmem:[%s215] sm:$0xff] %v772
        %777 = vst [vmem:[%s215 + $0x8] sm:$0xff] %v773
        %778 = vst [vmem:[%s215 + $0x10] sm:$0xff] %v774
        %779 = vst [vmem:[%s215 + $0x18] sm:$0xff] %v775
        %s780 = sand.u32 %s96, 1
        %s781 = scalar_lea.sflag [#allocation5], %s780
        %s782 = sand.u32 %s96, 1
        %s783 = smul.addr %s782, 32
        %s784 = scalar_lea.vmem [#allocation8], %s783
        // Predicated region
        $region37: #{tpu_custom_call.1} parent=27 // pred_check
          %p785 = pneg %p106
        $region38: #{tpu_custom_call.1} parent=27 // pred_check_branch
          %787 = sbr.rel (%p785) target = $region40
        $region39: #{tpu_custom_call.1} parent=27 // pred_region
          %s788 = smul.u32 2, %s26
          %s790 = ssub.s32 512, 512
          %791 = vsyncadd %s781, %s790
          %s792 = smul.addr %s788, 4
          %s793 = sadd.s32 %s27, %s792
          %s794 = smul.addr %s793, 128
          %s795 = scalar_lea.hbm %s2, %s794
          %s796 = sshll.u32 %s784, 4
          %s797 = int_to_ptr.vmem [resolvable:$true] %s796
          %802 = dma.vmem_to_hbm [thread:$0]  %s797, 512, %s795, %s781, 128, 256, 8
        $region40: #{tpu_custom_call.1} parent=27 // pred_fallthru
          _
      $region28: #{tpu_custom_call.1} parent=5 // pred_fallthru
        _
      %p803 = scmp.le.s32.totalorder 2, %s17
      // Predicated region
      $region41: #{tpu_custom_call.1} parent=5 // pred_check
        %p804 = pneg %p803
      $region42: #{tpu_custom_call.1} parent=5 // pred_check_branch
        %806 = sbr.rel (%p804) target = $region44
      $region43: #{tpu_custom_call.1} parent=5 // pred_region
        %s807 = ssub.s32 %s17, 2
        // Predicated region
        $region45: #{tpu_custom_call.1} parent=43 // pred_check
          %p808 = pneg %p112
        $region46: #{tpu_custom_call.1} parent=43 // pred_check_branch
          %810 = sbr.rel (%p808) target = $region48
        $region47: #{tpu_custom_call.1} parent=43 // pred_region
          %s811 = sand.u32 %s97, 1
          %s812 = scalar_lea.sflag [#allocation5], %s811
          %s813 = sand.u32 %s97, 1
          %s814 = smul.addr %s813, 32
          %s815 = scalar_lea.vmem [#allocation8], %s814
          %816 = dma.done %s812, 512
        $region48: #{tpu_custom_call.1} parent=43 // pred_fallthru
          _
      $region44: #{tpu_custom_call.1} parent=5 // pred_fallthru
        _
    $region6: #{tpu_custom_call.1} parent=1 // loop_footer
      %s21 = sadd.s32 1, %s17
    $region7: #{tpu_custom_call.1} parent=1 // loop_footer_branch
      %16 = sbr.rel target = $region3
    $region8: #{tpu_custom_call.1} parent=1 // loop_exit
      _
    %817 = vsyncpa [#allocation4], 1
    %s818 = scalar_lea.sflag [#allocation4], 1
    %819 = vsyncpa %s818, 1
    %820 = vsyncpa [#allocation7], 1
    %s821 = scalar_lea.sflag [#allocation7], 1
    %822 = vsyncpa %s821, 1
    %823 = vsyncpa [#allocation5], 1
    %s824 = scalar_lea.sflag [#allocation5], 1
    %825 = vsyncpa %s824, 1

</llo_original>
